<compile_context>
chip_gen: v6e
topology: v6e:2x2x1
jax: 0.10.0
libtpu: 0.0.40
codegen_flags: <defaults>
</compile_context>

<pallas_src>
import jax
import jax.numpy as jnp
from jax.experimental import pallas as pl
from jax.experimental.pallas import tpu as pltpu

n = 7
z_dimension = 10
HIDDEN = 64

H_PAD = 128      # padded hidden / layer-output width (64 -> 128, 7 -> 128); zero-pad is exact
MAX_TB = 1024    # max batch-tile rows (f32 I/O ~3 MiB VMEM incl. double-buffering)


def _round_up(x, m):
    return ((x + m - 1) // m) * m


def _pick_batch_tile(batch):
    """Batch tile: big tiles for throughput, >=2 grid steps when possible (v7x megacore)."""
    if batch >= 2 * MAX_TB:
        return MAX_TB
    half = _round_up(-(-batch // 2), 8)   # ceil(batch/2) rounded up to sublane multiple
    return max(8, min(half, MAX_TB))


def generator_kernel(x_ref, w1_ref, w23_ref, b_ref, o_ref):
    # x_ref: (TB, 17)  w1_ref: (17, 128)  w23_ref: (128, 256)  b_ref: (1, 384)  o_ref: (TB, n)
    cdt = w1_ref.dtype                      # compute dtype (bf16 or f32); accumulation is f32
    x = x_ref[...].astype(cdt)

    # Layer 1: Linear(17 -> 64) + ReLU   (output lane-padded to 128; zero-pad is exact)
    h = jnp.dot(x, w1_ref[...], preferred_element_type=jnp.float32)
    h = jnp.maximum(h + b_ref[:, 0:H_PAD], 0.0)

    # Layer 2: Linear(64 -> 64) + ReLU
    h = jnp.dot(h.astype(cdt), w23_ref[:, 0:H_PAD], preferred_element_type=jnp.float32)
    h = jnp.maximum(h + b_ref[:, H_PAD:2 * H_PAD], 0.0)

    # Layer 3: Linear(64 -> n), no activation
    out = jnp.dot(h.astype(cdt), w23_ref[:, H_PAD:2 * H_PAD], preferred_element_type=jnp.float32)
    out = out + b_ref[:, 2 * H_PAD:3 * H_PAD]
    o_ref[...] = out[:, : o_ref.shape[-1]].astype(o_ref.dtype)


def pack_params(params, compute_dtype=jnp.bfloat16):
    """Pack (w1,b1,w2,b2,w3,b3) -> (w1 (17,128), w2|w3 slab (128,256), bias slab (1,384) f32).

    Params are stored as weight (in, out) and bias (1, out).  (PyTorch nn.Linear stores
    (out, in) / (out,): transpose / reshape when importing trained weights.)
    """
    w1, b1, w2, b2, w3, b3 = params

    def pad_w(w):
        w = w.astype(jnp.float32)
        return jnp.pad(w, ((0, H_PAD - w.shape[0]), (0, H_PAD - w.shape[1])))

    def pad_b(b):
        b = b.astype(jnp.float32)
        return jnp.pad(b, ((0, 0), (0, H_PAD - b.shape[1])))

    w1p = jnp.pad(w1.astype(jnp.float32),
                  ((0, 0), (0, H_PAD - w1.shape[1]))).astype(compute_dtype)      # (17, 128)
    w23 = jnp.concatenate([pad_w(w2), pad_w(w3)], axis=1).astype(compute_dtype)  # (128, 256)
    b_slab = jnp.concatenate([pad_b(b1), pad_b(b2), pad_b(b3)], axis=1)          # (1, 384) f32
    return w1p, w23, b_slab


def _generator_forward(x, w1p, w23, b_slab, out_features):
    batch, in_dim = x.shape
    tb = _pick_batch_tile(batch)
    grid = (pl.cdiv(batch, tb),)

    return pl.pallas_call(
        generator_kernel,
        out_shape=jax.ShapeDtypeStruct((batch, out_features), jnp.float32),
        grid=grid,
        in_specs=[
            pl.BlockSpec((tb, in_dim), lambda i: (i, 0)),      # x tile streams (unpadded features)
            pl.BlockSpec(w1p.shape, lambda i: (0, 0)),         # layer-1 weights, VMEM-resident
            pl.BlockSpec(w23.shape, lambda i: (0, 0)),         # layer-2/3 slab, VMEM-resident
            pl.BlockSpec(b_slab.shape, lambda i: (0, 0)),      # bias slab, VMEM-resident
        ],
        out_specs=pl.BlockSpec((tb, out_features), lambda i: (i, 0)),
        compiler_params=pltpu.CompilerParams(
            dimension_semantics=("parallel",),                 # batch tiles split across TCs
        ),
    )(x, w1p, w23, b_slab)


def make_generator(params, compute_dtype=jnp.bfloat16):
    """Pack parameters once (hoisted out of the per-call path) and return a jitted apply fn."""
    w1p, w23, b_slab = pack_params(params, compute_dtype)
    out_features = params[4].shape[1]

    @jax.jit
    def apply(x):
        return _generator_forward(x, w1p, w23, b_slab, out_features)

    return apply


def generator_forward(x, params, compute_dtype=jnp.bfloat16):
    """One-shot convenience wrapper (prefer make_generator for repeated calls)."""
    return make_generator(params, compute_dtype)(x)


def init_params(key, in_dim, hidden, out_dim):
    """Deterministic init mimicking PyTorch Linear default (uniform +/- 1/sqrt(fan_in))."""
    ks = jax.random.split(key, 6)

    def lin(kw, kb, fan_in, fan_out):
        bound = 1.0 / jnp.sqrt(fan_in)
        w = jax.random.uniform(kw, (fan_in, fan_out), jnp.float32, -bound, bound)
        b = jax.random.uniform(kb, (1, fan_out), jnp.float32, -bound, bound)
        return w, b

    w1, b1 = lin(ks[0], ks[1], in_dim, hidden)
    w2, b2 = lin(ks[2], ks[3], hidden, hidden)
    w3, b3 = lin(ks[4], ks[5], hidden, out_dim)
    return (w1, b1, w2, b2, w3, b3)


def reference_forward(x, params, compute_dtype=jnp.float32):
    """Pure-JAX reference; compute_dtype rounds matmul operands (f32 accumulation)."""
    w1, b1, w2, b2, w3, b3 = params
    c = lambda a: a.astype(compute_dtype).astype(jnp.float32)
    hi = jax.lax.Precision.HIGHEST
    h = jnp.maximum(jnp.dot(c(x), c(w1), precision=hi) + b1, 0.0)
    h = jnp.maximum(jnp.dot(c(h), c(w2), precision=hi) + b2, 0.0)
    return jnp.dot(c(h), c(w3), precision=hi) + b3


if __name__ == "__main__":
    key = jax.random.PRNGKey(0)
    k_x, k_p = jax.random.split(key)

    batch = 8
    in_dim = z_dimension + n  # 17

    x = jax.random.normal(k_x, (batch, in_dim), dtype=jnp.float32)
    params = init_params(k_p, in_dim, HIDDEN, n)

    # Default path: bf16 operands, f32 accumulation (fastest on all generations).
    gen_bf16 = make_generator(params, compute_dtype=jnp.bfloat16)
    out = jax.block_until_ready(gen_bf16(x))
    assert out.shape == (batch, n), out.shape
    ref_b = reference_forward(x, params, compute_dtype=jnp.bfloat16)
    assert jnp.allclose(out, ref_b, atol=1e-4, rtol=1e-3), "bf16 path mismatch vs reference"

    # Exact-f32 validation path (matches PyTorch math bit-for-bit up to accumulation order).
    gen_f32 = make_generator(params, compute_dtype=jnp.float32)
    out32 = jax.block_until_ready(gen_f32(x))
    ref_f = reference_forward(x, params, compute_dtype=jnp.float32)
    assert jnp.allclose(out32, ref_f, atol=1e-5, rtol=1e-5), "f32 path mismatch vs reference"

    print("KERNEL_OK")
</pallas_src>

<mosaic_0001>
module attributes {stable_mosaic.version = 11 : i64} {
  func.func @generator_kernel(%arg0: i32, %arg1: memref<8x17xf32, #tpu.memory_space<vmem>>, %arg2: memref<17x128xbf16, #tpu.memory_space<vmem>>, %arg3: memref<128x256xbf16, #tpu.memory_space<vmem>>, %arg4: memref<1x384xf32, #tpu.memory_space<vmem>>, %arg5: memref<8x7xf32, #tpu.memory_space<vmem>>) attributes {dimension_semantics = [#tpu.dimension_semantics<parallel>], iteration_bounds = array<i64: 1>, scalar_prefetch = 0 : i64, scratch_operands = 0 : i64, tpu.core_type = #tpu.core_type<tc>, window_params = [{transform_indices = @transform_0, window_bounds = array<i64: 8, 17>}, {pipeline_mode = #tpu.pipeline_mode<synchronous>, transform_indices = @transform_1, window_bounds = array<i64: 17, 128>}, {pipeline_mode = #tpu.pipeline_mode<synchronous>, transform_indices = @transform_2, window_bounds = array<i64: 128, 256>}, {pipeline_mode = #tpu.pipeline_mode<synchronous>, transform_indices = @transform_3, window_bounds = array<i64: 1, 384>}, {transform_indices = @transform_4, window_bounds = array<i64: 8, 7>}]} {
    %c0 = arith.constant 0 : index
    %c0_0 = arith.constant 0 : index
    %0 = vector.load %arg1[%c0, %c0_0] : memref<8x17xf32, #tpu.memory_space<vmem>>, vector<8x17xf32>
    %1 = arith.truncf %0 : vector<8x17xf32> to vector<8x17xbf16>
    %c0_1 = arith.constant 0 : index
    %c0_2 = arith.constant 0 : index
    %2 = vector.load %arg2[%c0_1, %c0_2] : memref<17x128xbf16, #tpu.memory_space<vmem>>, vector<17x128xbf16>
    %cst = arith.constant dense<0.000000e+00> : vector<8x128xf32>
    %3 = tpu.matmul %1, %2, %cst {dimension_numbers = #tpu.dot_dimension_numbers<[1], [0], [0], [1], [0, 0, 1, 1], [], []>} : vector<8x17xbf16>, vector<17x128xbf16>, vector<8x128xf32> -> vector<8x128xf32>
    %c0_3 = arith.constant 0 : index
    %c0_4 = arith.constant 0 : index
    %4 = vector.load %arg4[%c0_3, %c0_4] : memref<1x384xf32, #tpu.memory_space<vmem>>, vector<1x128xf32>
    %5 = vector.broadcast %4 : vector<1x128xf32> to vector<8x128xf32>
    %6 = arith.addf %3, %5 : vector<8x128xf32>
    %cst_5 = arith.constant 0.000000e+00 : f32
    %7 = vector.broadcast %cst_5 : f32 to vector<8x128xf32>
    %8 = arith.maximumf %6, %7 : vector<8x128xf32>
    %9 = arith.truncf %8 : vector<8x128xf32> to vector<8x128xbf16>
    %c0_6 = arith.constant 0 : index
    %c0_7 = arith.constant 0 : index
    %10 = vector.load %arg3[%c0_6, %c0_7] : memref<128x256xbf16, #tpu.memory_space<vmem>>, vector<128x128xbf16>
    %cst_8 = arith.constant dense<0.000000e+00> : vector<8x128xf32>
    %11 = tpu.matmul %9, %10, %cst_8 {dimension_numbers = #tpu.dot_dimension_numbers<[1], [0], [0], [1], [0, 0, 1, 1], [], []>} : vector<8x128xbf16>, vector<128x128xbf16>, vector<8x128xf32> -> vector<8x128xf32>
    %c0_9 = arith.constant 0 : index
    %c128 = arith.constant 128 : index
    %12 = vector.load %arg4[%c0_9, %c128] : memref<1x384xf32, #tpu.memory_space<vmem>>, vector<1x128xf32>
    %13 = vector.broadcast %12 : vector<1x128xf32> to vector<8x128xf32>
    %14 = arith.addf %11, %13 : vector<8x128xf32>
    %cst_10 = arith.constant 0.000000e+00 : f32
    %15 = vector.broadcast %cst_10 : f32 to vector<8x128xf32>
    %16 = arith.maximumf %14, %15 : vector<8x128xf32>
    %17 = arith.truncf %16 : vector<8x128xf32> to vector<8x128xbf16>
    %c0_11 = arith.constant 0 : index
    %c128_12 = arith.constant 128 : index
    %18 = vector.load %arg3[%c0_11, %c128_12] : memref<128x256xbf16, #tpu.memory_space<vmem>>, vector<128x128xbf16>
    %cst_13 = arith.constant dense<0.000000e+00> : vector<8x128xf32>
    %19 = tpu.matmul %17, %18, %cst_13 {dimension_numbers = #tpu.dot_dimension_numbers<[1], [0], [0], [1], [0, 0, 1, 1], [], []>} : vector<8x128xbf16>, vector<128x128xbf16>, vector<8x128xf32> -> vector<8x128xf32>
    %c0_14 = arith.constant 0 : index
    %c256 = arith.constant 256 : index
    %20 = vector.load %arg4[%c0_14, %c256] : memref<1x384xf32, #tpu.memory_space<vmem>>, vector<1x128xf32>
    %21 = vector.broadcast %20 : vector<1x128xf32> to vector<8x128xf32>
    %22 = arith.addf %19, %21 : vector<8x128xf32>
    %23 = vector.extract_strided_slice %22 {offsets = [0, 0], sizes = [8, 7], strides = [1, 1]} : vector<8x128xf32> to vector<8x7xf32>
    %c0_15 = arith.constant 0 : index
    %c0_16 = arith.constant 0 : index
    %24 = vector.load %arg5[%c0_15, %c0_16] : memref<8x7xf32, #tpu.memory_space<vmem>>, vector<8x7xf32>
    tpu.vector_store %arg5[%c0_15, %c0_16], %23 {strides = array<i32>} : memref<8x7xf32, #tpu.memory_space<vmem>>, vector<8x7xf32>,
    return
  }
  func.func @transform_0(%arg0: i32) -> (i32, i32) {
    %c0_i32 = arith.constant 0 : i32
    %c0_i32_0 = arith.constant 0 : i32
    return %arg0, %c0_i32 : i32, i32
  }
  func.func @transform_1(%arg0: i32) -> (i32, i32) {
    %c0_i32 = arith.constant 0 : i32
    %c0_i32_0 = arith.constant 0 : i32
    %c0_i32_1 = arith.constant 0 : i32
    return %c0_i32, %c0_i32_0 : i32, i32
  }
  func.func @transform_2(%arg0: i32) -> (i32, i32) {
    %c0_i32 = arith.constant 0 : i32
    %c0_i32_0 = arith.constant 0 : i32
    %c0_i32_1 = arith.constant 0 : i32
    return %c0_i32, %c0_i32_0 : i32, i32
  }
  func.func @transform_3(%arg0: i32) -> (i32, i32) {
    %c0_i32 = arith.constant 0 : i32
    %c0_i32_0 = arith.constant 0 : i32
    %c0_i32_1 = arith.constant 0 : i32
    return %c0_i32, %c0_i32_0 : i32, i32
  }
  func.func @transform_4(%arg0: i32) -> (i32, i32) {
    %c0_i32 = arith.constant 0 : i32
    %c0_i32_0 = arith.constant 0 : i32
    return %arg0, %c0_i32 : i32, i32
  }
}

</mosaic_0001>

<llo_original>
// kernel: apply.1
$region0: #{apply.1}
  #allocation0 [shape = 'u32[]', space=smem, size = 0x4, offset = 0x4, fixed_abs, tag = 'smem constant byte address 0x4 - core index']
  #allocation1 [shape = 'u32[144,128]{1,0:T(1,128)}', space=vmem, size = 0x12000, scoped, tag = 'internal scratch']
  %s0 = inlined_call_operand.hbm [shape: f32[8,17], index: 0, kind: input, shape index: {}]
  %s1 = inlined_call_operand.hbm [shape: bf16[17,128], index: 1, kind: input, shape index: {}]
  %s2 = inlined_call_operand.hbm [shape: bf16[128,256], index: 2, kind: input, shape index: {}]
  %s3 = inlined_call_operand.vmem [shape: f32[1,384], index: 3, kind: input, shape index: {}]
  %s4 = inlined_call_operand.hbm [shape: f32[8,7], index: 4, kind: output, shape index: {}]
  %s5 = sld [smem:[#allocation0]]
  $region38: #{apply.1} parent=0
    _
  %s7 = ssub.s32 1, %s5
  %s8 = scalar_select 0, %s7, %s5
  $region1: #{apply.1} parent=0
    #allocation2 [shape = 'u8[4096]{0}', space=vmem, size = 0x1000, scoped, tag = 'input window, operand 0, single buffered']
    #allocation3 [shape = 's32[1]{0}', space=sflag, size = 0x4, scoped, tag = 'scoped memory for apply.1']
    #allocation4 [shape = 's32[1]{0}', space=sflag, size = 0x4, scoped, tag = 'scoped memory for apply.1']
    #allocation5 [shape = 'u8[6144]{0}', space=vmem, size = 0x1800, scoped, tag = 'input window, operand 1, single buffered']
    #allocation6 [shape = 's32[1]{0}', space=sflag, size = 0x4, scoped, tag = 'scoped memory for apply.1']
    #allocation7 [shape = 'u8[65536]{0}', space=vmem, size = 0x10000, scoped, tag = 'input window, operand 2, single buffered']
    #allocation8 [shape = 'u8[4096]{0}', space=vmem, size = 0x1000, scoped, tag = 'output window, operand 0, single buffered']
    %9 = vsyncpa [#allocation3], 0
    %10 = vsyncpa [#allocation6], 0
    %11 = vsyncpa [#allocation4], 0
    // Predicated region
    $region2: #{apply.1} parent=1 // pred_check
      _
    $region3: #{apply.1} parent=1 // pred_check_branch
      %13 = sbr.rel (0) target = $region5
    $region4: #{apply.1} parent=1 // pred_region
      %s15 = ssub.s32 128, 128
      %16 = vsyncadd [#allocation3], %s15
      %s18 = sshll.u32 [#allocation2], 4
      %s19 = int_to_ptr.vmem [resolvable:$true] %s18
      %21 = dma.hbm_to_vmem [thread:$0]  %s0, 128, %s19, [#allocation3]
    $region5: #{apply.1} parent=1 // pred_fallthru
      _
    // Predicated region
    $region6: #{apply.1} parent=1 // pred_check
      _
    $region7: #{apply.1} parent=1 // pred_check_branch
      %23 = sbr.rel (0) target = $region9
    $region8: #{apply.1} parent=1 // pred_region
      %s25 = ssub.s32 192, 192
      %26 = vsyncadd [#allocation6], %s25
      %s27 = sshll.u32 [#allocation5], 4
      %s28 = int_to_ptr.vmem [resolvable:$true] %s27
      %33 = dma.hbm_to_vmem [thread:$0]  %s1, 192, %s28, [#allocation6], 64, 64, 4
    $region9: #{apply.1} parent=1 // pred_fallthru
      _
    // Predicated region
    $region10: #{apply.1} parent=1 // pred_check
      _
    $region11: #{apply.1} parent=1 // pred_check_branch
      %35 = sbr.rel (0) target = $region13
    $region12: #{apply.1} parent=1 // pred_region
      %s37 = ssub.s32 2048, 2048
      %38 = vsyncadd [#allocation6], %s37
      %s39 = sshll.u32 [#allocation7], 4
      %s40 = int_to_ptr.vmem [resolvable:$true] %s39
      %45 = dma.hbm_to_vmem [thread:$0]  %s2, 2048, %s40, [#allocation6], 128, 128, 8
    $region13: #{apply.1} parent=1 // pred_fallthru
      _
    // Predicated region
    $region14: #{apply.1} parent=1 // pred_check
      _
    $region15: #{apply.1} parent=1 // pred_check_branch
      %47 = sbr.rel (0) target = $region17
    $region16: #{apply.1} parent=1 // pred_region
      _
    $region17: #{apply.1} parent=1 // pred_fallthru
      _
    // Predicated region
    $region18: #{apply.1} parent=1 // pred_check
      _
    $region19: #{apply.1} parent=1 // pred_check_branch
      %49 = sbr.rel (0) target = $region21
    $region20: #{apply.1} parent=1 // pred_region
      %50 = dma.done [#allocation3], 128
    $region21: #{apply.1} parent=1 // pred_fallthru
      _
    // Predicated region
    $region22: #{apply.1} parent=1 // pred_check
      _
    $region23: #{apply.1} parent=1 // pred_check_branch
      %52 = sbr.rel (0) target = $region25
    $region24: #{apply.1} parent=1 // pred_region
      %53 = dma.done [#allocation6], 192
    $region25: #{apply.1} parent=1 // pred_fallthru
      _
    // Predicated region
    $region26: #{apply.1} parent=1 // pred_check
      _
    $region27: #{apply.1} parent=1 // pred_check_branch
      %55 = sbr.rel (0) target = $region29
    $region28: #{apply.1} parent=1 // pred_region
      %56 = dma.done [#allocation6], 2048
    $region29: #{apply.1} parent=1 // pred_fallthru
      _
    %v58 = vld [vmem:[#allocation2] sm:$0xff]
    %v59 = vpack.c.bf16 %v58, %v58
    %v60 = vld [vmem:[#allocation5] sm:$0xf]
    %v61 = vld [vmem:[#allocation5 + $0x4] sm:$0xf]
    %v62 = vld [vmem:[#allocation5 + $0x8] sm:$0x1]
    %v63 = vld [vmem:[%s3] sm:$0x1]
    %v65 = vlaneseq
    %v66 = vshrl.u32 %v65, 7
    %v67 = vsub.s32 0, %v66
    %v68 = vrot.slane %v63, %v67
    %v73 = vunpack.c.l.b16 %v60
    %v74 = vunpack.c.l.b16 %v61
    %v75 = vunpack.c.l.b16 %v62
    %v76 = vpack.c.b16 %v74, %v73
    %v77 = vpack.c.b16 %v75, %v75
    %vm79 = vcmask 138240
    %v81 = vsel %vm79, %v59, 0
    %vm83 = vcmask 1040384
    %v84 = vsel 0, 4294967295, 65535
    %v85 = vsel %vm83, %v84, 0
    %v87 = vand.u32 %v77, %v85
    %89 = vmatprep.subr.bf16.mxu0 0
    %90 = vmatpush1.bf16.msra.mxu0 0
    %91 = vmatprep.subr.bf16.mxu0 0
    %92 = vmatpush1.bf16.msra.mxu0 0
    %93 = vmatprep.subr.bf16.mxu0 0
    %94 = vmatpush1.bf16.msra.mxu0 0
    %95 = vmatprep.subr.bf16.mxu0 0
    %96 = vmatpush1.bf16.msra.mxu0 0
    %97 = vmatprep.subr.bf16.mxu0 0
    %98 = vmatpush1.bf16.msra.mxu0 0
    %99 = vmatprep.subr.bf16.mxu0 0
    %100 = vmatpush1.bf16.msra.mxu0 0
    %101 = vmatprep.subr.bf16.mxu0 0
    %102 = vmatpush1.bf16.msra.mxu0 %v87
    %103 = vmatprep.subr.bf16.mxu0 0
    %104 = vmatpush1.bf16.msra.mxu0 %v76
    %105 = vmatprep.subr.bf16.mxu0 0
    %106 = vmatpush2.bf16.msra.mxu0 0
    %107 = vmatprep.subr.bf16.mxu0 0
    %108 = vmatpush2.bf16.msra.mxu0 0
    %109 = vmatprep.subr.bf16.mxu0 0
    %110 = vmatpush2.bf16.msra.mxu0 0
    %111 = vmatprep.subr.bf16.mxu0 0
    %112 = vmatpush2.bf16.msra.mxu0 0
    %113 = vmatprep.subr.bf16.mxu0 0
    %114 = vmatpush2.bf16.msra.mxu0 0
    %115 = vmatprep.subr.bf16.mxu0 0
    %116 = vmatpush2.bf16.msra.mxu0 0
    %117 = vmatprep.subr.bf16.mxu0 0
    %118 = vmatpush2.bf16.msra.mxu0 0
    %119 = vmatprep.subr.bf16.mxu0 0
    %120 = vmatpush2.bf16.msra.mxu0 0
    %121 = vmatprep.mubr.bf16.mxu0 0
    %122 = vmatmul.mubr.bf16.gmra.mxu0 %v81
    %v123 = vpop.f32.mrf.mxu0
    %v124 = vadd.f32 %v68, %v123
    %v125 = vpop.f32.mrf.mxu0
    %v126 = vpop.f32.mrf.mxu0
    %v127 = vpop.f32.mrf.mxu0
    %128 = vdwg.mxu0
    %v129 = vmax.f32 %v124, 0.0
    %v130 = vpack.c.bf16 %v129, %v129
    %v131 = vld [vmem:[#allocation7] sm:$0xf]
    %v132 = vld [vmem:[#allocation7 + $0x8] sm:$0xf]
    %v133 = vld [vmem:[#allocation7 + $0x10] sm:$0xf]
    %v134 = vld [vmem:[#allocation7 + $0x18] sm:$0xf]
    %v135 = vld [vmem:[#allocation7 + $0x20] sm:$0xf]
    %v136 = vld [vmem:[#allocation7 + $0x28] sm:$0xf]
    %v137 = vld [vmem:[#allocation7 + $0x30] sm:$0xf]
    %v138 = vld [vmem:[#allocation7 + $0x38] sm:$0xf]
    %v139 = vld [vmem:[#allocation7 + $0x40] sm:$0xf]
    %v140 = vld [vmem:[#allocation7 + $0x48] sm:$0xf]
    %v141 = vld [vmem:[#allocation7 + $0x50] sm:$0xf]
    %v142 = vld [vmem:[#allocation7 + $0x58] sm:$0xf]
    %v143 = vld [vmem:[#allocation7 + $0x60] sm:$0xf]
    %v144 = vld [vmem:[#allocation7 + $0x68] sm:$0xf]
    %v145 = vld [vmem:[#allocation7 + $0x70] sm:$0xf]
    %v146 = vld [vmem:[#allocation7 + $0x78] sm:$0xf]
    %v147 = vld [vmem:[%s3 + $0x1] sm:$0x1]
    %v149 = vlaneseq
    %v150 = vshrl.u32 %v149, 7
    %v151 = vsub.s32 0, %v150
    %v152 = vrot.slane %v147, %v151
    %v170 = vunpack.c.l.b16 %v131
    %v171 = vunpack.c.l.b16 %v132
    %v172 = vunpack.c.l.b16 %v133
    %v173 = vunpack.c.l.b16 %v134
    %v174 = vunpack.c.l.b16 %v135
    %v175 = vunpack.c.l.b16 %v136
    %v176 = vunpack.c.l.b16 %v137
    %v177 = vunpack.c.l.b16 %v138
    %v178 = vunpack.c.l.b16 %v139
    %v179 = vunpack.c.l.b16 %v140
    %v180 = vunpack.c.l.b16 %v141
    %v181 = vunpack.c.l.b16 %v142
    %v182 = vunpack.c.l.b16 %v143
    %v183 = vunpack.c.l.b16 %v144
    %v184 = vunpack.c.l.b16 %v145
    %v185 = vunpack.c.l.b16 %v146
    %v186 = vpack.c.b16 %v171, %v170
    %v187 = vpack.c.b16 %v173, %v172
    %v188 = vpack.c.b16 %v175, %v174
    %v189 = vpack.c.b16 %v177, %v176
    %v190 = vpack.c.b16 %v179, %v178
    %v191 = vpack.c.b16 %v181, %v180
    %v192 = vpack.c.b16 %v183, %v182
    %v193 = vpack.c.b16 %v185, %v184
    %202 = vmatprep.subr.bf16.mxu0 0
    %203 = vmatpush1.bf16.msra.mxu0 %v193
    %204 = vmatprep.subr.bf16.mxu0 0
    %205 = vmatpush1.bf16.msra.mxu0 %v192
    %206 = vmatprep.subr.bf16.mxu0 0
    %207 = vmatpush1.bf16.msra.mxu0 %v191
    %208 = vmatprep.subr.bf16.mxu0 0
    %209 = vmatpush1.bf16.msra.mxu0 %v190
    %210 = vmatprep.subr.bf16.mxu0 0
    %211 = vmatpush1.bf16.msra.mxu0 %v189
    %212 = vmatprep.subr.bf16.mxu0 0
    %213 = vmatpush1.bf16.msra.mxu0 %v188
    %214 = vmatprep.subr.bf16.mxu0 0
    %215 = vmatpush1.bf16.msra.mxu0 %v187
    %216 = vmatprep.subr.bf16.mxu0 0
    %217 = vmatpush1.bf16.msra.mxu0 %v186
    %218 = vmatprep.subr.bf16.mxu0 0
    %219 = vmatpush2.bf16.msra.mxu0 0
    %220 = vmatprep.subr.bf16.mxu0 0
    %221 = vmatpush2.bf16.msra.mxu0 0
    %222 = vmatprep.subr.bf16.mxu0 0
    %223 = vmatpush2.bf16.msra.mxu0 0
    %224 = vmatprep.subr.bf16.mxu0 0
    %225 = vmatpush2.bf16.msra.mxu0 0
    %226 = vmatprep.subr.bf16.mxu0 0
    %227 = vmatpush2.bf16.msra.mxu0 0
    %228 = vmatprep.subr.bf16.mxu0 0
    %229 = vmatpush2.bf16.msra.mxu0 0
    %230 = vmatprep.subr.bf16.mxu0 0
    %231 = vmatpush2.bf16.msra.mxu0 0
    %232 = vmatprep.subr.bf16.mxu0 0
    %233 = vmatpush2.bf16.msra.mxu0 0
    %234 = vmatprep.mubr.bf16.mxu0 0
    %235 = vmatmul.mubr.bf16.gmra.mxu0 %v130
    %v236 = vpop.f32.mrf.mxu0
    %v237 = vadd.f32 %v152, %v236
    %v238 = vpop.f32.mrf.mxu0
    %v239 = vpop.f32.mrf.mxu0
    %v240 = vpop.f32.mrf.mxu0
    %241 = vdwg.mxu0
    %v242 = vmax.f32 %v237, 0.0
    %v243 = vpack.c.bf16 %v242, %v242
    %v244 = vld [vmem:[#allocation7 + $0x4] sm:$0xf]
    %v245 = vld [vmem:[#allocation7 + $0xc] sm:$0xf]
    %v246 = vld [vmem:[#allocation7 + $0x14] sm:$0xf]
    %v247 = vld [vmem:[#allocation7 + $0x1c] sm:$0xf]
    %v248 = vld [vmem:[#allocation7 + $0x24] sm:$0xf]
    %v249 = vld [vmem:[#allocation7 + $0x2c] sm:$0xf]
    %v250 = vld [vmem:[#allocation7 + $0x34] sm:$0xf]
    %v251 = vld [vmem:[#allocation7 + $0x3c] sm:$0xf]
    %v252 = vld [vmem:[#allocation7 + $0x44] sm:$0xf]
    %v253 = vld [vmem:[#allocation7 + $0x4c] sm:$0xf]
    %v254 = vld [vmem:[#allocation7 + $0x54] sm:$0xf]
    %v255 = vld [vmem:[#allocation7 + $0x5c] sm:$0xf]
    %v256 = vld [vmem:[#allocation7 + $0x64] sm:$0xf]
    %v257 = vld [vmem:[#allocation7 + $0x6c] sm:$0xf]
    %v258 = vld [vmem:[#allocation7 + $0x74] sm:$0xf]
    %v259 = vld [vmem:[#allocation7 + $0x7c] sm:$0xf]
    %v260 = vld [vmem:[%s3 + $0x2] sm:$0x1]
    %v262 = vlaneseq
    %v263 = vshrl.u32 %v262, 7
    %v264 = vsub.s32 0, %v263
    %v265 = vrot.slane %v260, %v264
    %v283 = vunpack.c.l.b16 %v244
    %v284 = vunpack.c.l.b16 %v245
    %v285 = vunpack.c.l.b16 %v246
    %v286 = vunpack.c.l.b16 %v247
    %v287 = vunpack.c.l.b16 %v248
    %v288 = vunpack.c.l.b16 %v249
    %v289 = vunpack.c.l.b16 %v250
    %v290 = vunpack.c.l.b16 %v251
    %v291 = vunpack.c.l.b16 %v252
    %v292 = vunpack.c.l.b16 %v253
    %v293 = vunpack.c.l.b16 %v254
    %v294 = vunpack.c.l.b16 %v255
    %v295 = vunpack.c.l.b16 %v256
    %v296 = vunpack.c.l.b16 %v257
    %v297 = vunpack.c.l.b16 %v258
    %v298 = vunpack.c.l.b16 %v259
    %v299 = vpack.c.b16 %v284, %v283
    %v300 = vpack.c.b16 %v286, %v285
    %v301 = vpack.c.b16 %v288, %v287
    %v302 = vpack.c.b16 %v290, %v289
    %v303 = vpack.c.b16 %v292, %v291
    %v304 = vpack.c.b16 %v294, %v293
    %v305 = vpack.c.b16 %v296, %v295
    %v306 = vpack.c.b16 %v298, %v297
    %315 = vmatprep.subr.bf16.mxu0 0
    %316 = vmatpush1.bf16.msra.mxu0 %v306
    %317 = vmatprep.subr.bf16.mxu0 0
    %318 = vmatpush1.bf16.msra.mxu0 %v305
    %319 = vmatprep.subr.bf16.mxu0 0
    %320 = vmatpush1.bf16.msra.mxu0 %v304
    %321 = vmatprep.subr.bf16.mxu0 0
    %322 = vmatpush1.bf16.msra.mxu0 %v303
    %323 = vmatprep.subr.bf16.mxu0 0
    %324 = vmatpush1.bf16.msra.mxu0 %v302
    %325 = vmatprep.subr.bf16.mxu0 0
    %326 = vmatpush1.bf16.msra.mxu0 %v301
    %327 = vmatprep.subr.bf16.mxu0 0
    %328 = vmatpush1.bf16.msra.mxu0 %v300
    %329 = vmatprep.subr.bf16.mxu0 0
    %330 = vmatpush1.bf16.msra.mxu0 %v299
    %331 = vmatprep.subr.bf16.mxu0 0
    %332 = vmatpush2.bf16.msra.mxu0 0
    %333 = vmatprep.subr.bf16.mxu0 0
    %334 = vmatpush2.bf16.msra.mxu0 0
    %335 = vmatprep.subr.bf16.mxu0 0
    %336 = vmatpush2.bf16.msra.mxu0 0
    %337 = vmatprep.subr.bf16.mxu0 0
    %338 = vmatpush2.bf16.msra.mxu0 0
    %339 = vmatprep.subr.bf16.mxu0 0
    %340 = vmatpush2.bf16.msra.mxu0 0
    %341 = vmatprep.subr.bf16.mxu0 0
    %342 = vmatpush2.bf16.msra.mxu0 0
    %343 = vmatprep.subr.bf16.mxu0 0
    %344 = vmatpush2.bf16.msra.mxu0 0
    %345 = vmatprep.subr.bf16.mxu0 0
    %346 = vmatpush2.bf16.msra.mxu0 0
    %347 = vmatprep.mubr.bf16.mxu0 0
    %348 = vmatmul.mubr.bf16.gmra.mxu0 %v243
    %v349 = vpop.f32.mrf.mxu0
    %v350 = vadd.f32 %v265, %v349
    %v351 = vpop.f32.mrf.mxu0
    %v352 = vpop.f32.mrf.mxu0
    %v353 = vpop.f32.mrf.mxu0
    %354 = vdwg.mxu0
    %vm355 = vcmask 56320
    %356 = vst.msk [vmem:[#allocation8] sm:$0xff] %vm355, %v350
    // Predicated region
    $region30: #{apply.1} parent=1 // pred_check
      _
    $region31: #{apply.1} parent=1 // pred_check_branch
      %358 = sbr.rel (0) target = $region33
    $region32: #{apply.1} parent=1 // pred_region
      %s360 = ssub.s32 128, 128
      %361 = vsyncadd [#allocation4], %s360
      %s363 = sshll.u32 [#allocation8], 4
      %s364 = int_to_ptr.vmem [resolvable:$true] %s363
      %366 = dma.vmem_to_hbm [thread:$0]  %s364, 128, %s4, [#allocation4]
    $region33: #{apply.1} parent=1 // pred_fallthru
      _
    // Predicated region
    $region34: #{apply.1} parent=1 // pred_check
      _
    $region35: #{apply.1} parent=1 // pred_check_branch
      %368 = sbr.rel (0) target = $region37
    $region36: #{apply.1} parent=1 // pred_region
      %369 = dma.done [#allocation4], 128
    $region37: #{apply.1} parent=1 // pred_fallthru
      _
    %370 = vsyncpa [#allocation3], 1
    %371 = vsyncpa [#allocation6], 1
    %372 = vsyncpa [#allocation4], 1

</llo_original>
